<compile_context>
chip_gen: v7x
topology: tpu7x:2x2x1
jax: 0.10.0
libtpu: 0.0.40
codegen_flags: <defaults>
</compile_context>

<pallas_src>
import functools

import jax
import jax.numpy as jnp
from jax.experimental import pallas as pl
from jax.experimental.pallas import tpu as pltpu

_LANE = 128


def _cdiv(a, b):
    return -(-a // b)


def _round_up(x, m):
    return _cdiv(x, m) * m


@functools.lru_cache(maxsize=None)
def _vmem_budget():
    """(per-step working-set target, scoped-VMEM limit) in bytes for this chip."""
    fallback_cap = 64 * 1024 * 1024            # smallest per-TC VMEM (v7x)
    try:
        cap = int(getattr(pltpu.get_tpu_info(), "vmem_capacity_bytes",
                          fallback_cap))
    except Exception:                          # unknown platform / interpret mode
        cap = fallback_cap
    # 128 MiB chips (v5e/v6e): working 32 MiB, limit 64 MiB.
    #  64 MiB chips (v7x)    : working 28 MiB, limit 48 MiB.
    working = min(32 * 1024 * 1024, (cap * 7) // 16)
    limit = min(2 * working, (cap * 3) // 4)
    return working, limit


def _plan_tiles(r, s, itemsize, vmem_working_set):
    """Pick tiling.  Returns (row_tile, s_chunk, n_k, tail_len)."""
    s_pad = _round_up(s, _LANE)
    # Full-S block cost per row: 2 input buffers + 2 lane-padded output buffers.
    per_row_full = (2 * s_pad + 2 * _LANE) * itemsize
    rows_full = vmem_working_set // per_row_full

    if r <= rows_full or rows_full >= _LANE:
        # ---- Single S chunk (the common case). ----
        if r <= rows_full:
            row_tile = r                       # full-extent row block (always legal)
            if r >= 4 * _LANE:
                # Split the parallel row axis into two ~balanced 128-multiples
                # so both TensorCores of a 2-TC chip (v7x) get work.
                row_tile = _LANE * _cdiv(_cdiv(r, _LANE), 2)
        else:
            row_tile = (rows_full // _LANE) * _LANE   # >=128, multiple of 128
        return row_tile, s, 1, None

    # ---- Chunked S axis (large feature maps). ----
    # Row tile: full extent for few rows; 128 when r >= 256 so the parallel row
    # axis has >= 2 tiles (megacore coverage) and tiles stay 128-aligned.
    row_tile = _LANE if r >= 2 * _LANE else r
    rows_eff = _round_up(row_tile, 8)
    # Budget: 2 input buffers + 2 lane-padded output buffers + (rows,128) scratch.
    s_budget = (vmem_working_set // (rows_eff * itemsize) - 3 * _LANE) // 2
    s_budget = max(_LANE, (s_budget // _LANE) * _LANE)
    n_k = _cdiv(s, s_budget)
    if n_k <= 1:
        return row_tile, s, 1, None
    # Balance the chunks; this often removes the masked ragged tail entirely.
    s_chunk = _round_up(_cdiv(s, n_k), _LANE)
    n_k = _cdiv(s, s_chunk)
    tail = s - (n_k - 1) * s_chunk
    tail_len = None if tail == s_chunk else tail
    return row_tile, s_chunk, n_k, tail_len


def _mac_kernel_single(x_ref, o_ref):
    """Whole S axis in one block: direct row-wise max, no accumulator."""
    o_ref[...] = jnp.max(x_ref[...], axis=-1, keepdims=True)


def _acc_update(acc_ref, p, k):
    @pl.when(k == 0)
    def _():
        acc_ref[...] = p

    @pl.when(k != 0)
    def _():
        acc_ref[...] = jnp.maximum(acc_ref[...], p)


def _mac_kernel_chunked(x_ref, o_ref, acc_ref, *, n_k, s_chunk, tail_len, fill):
    """Running max over chunked S; (row_tile, 128) scratch is the accumulator."""
    k = pl.program_id(1)
    last = n_k - 1
    x = x_ref[...]
    n_blk = s_chunk // _LANE

    def lane_fold(xv):
        # (row_tile, s_chunk) -> (row_tile, 128) with pure VPU maxima over
        # 128-lane columns; keeps the cross-lane XLU reduce and the narrow
        # (row_tile, 1) store off the per-chunk path.
        p = xv[:, 0:_LANE]
        for j in range(1, n_blk):
            p = jnp.maximum(p, xv[:, j * _LANE:(j + 1) * _LANE])
        return p

    if tail_len is None:
        _acc_update(acc_ref, lane_fold(x), k)

        @pl.when(k == last)
        def _():
            o_ref[...] = jnp.max(acc_ref[...], axis=-1, keepdims=True)
    else:
        @pl.when(k != last)
        def _():
            _acc_update(acc_ref, lane_fold(x), k)

        @pl.when(k == last)
        def _():
            # Only the last chunk reads past the true S extent; mask it here so
            # interior chunks pay no iota/where cost.
            col = jax.lax.broadcasted_iota(jnp.int32, x.shape, 1)
            xm = jnp.where(col < tail_len, x, fill)
            # n_k >= 2 in this kernel, so acc_ref already holds interior maxima.
            o_ref[...] = jnp.max(jnp.maximum(acc_ref[...], lane_fold(xm)),
                                 axis=-1, keepdims=True)


@functools.partial(jax.jit, static_argnums=(1, 2))
def _mac_impl(x, vmem_working_set, vmem_limit):
    n, c, h, w = x.shape
    r, s = n * c, h * w
    dtype = x.dtype
    itemsize = jnp.dtype(dtype).itemsize
    xf = x.reshape(r, s)

    row_tile, s_chunk, n_k, tail_len = _plan_tiles(r, s, itemsize,
                                                   vmem_working_set)
    n_r = _cdiv(r, row_tile)

    cost = pl.CostEstimate(flops=r * s, transcendentals=0,
                           bytes_accessed=(r * s + r) * itemsize)

    if n_k == 1:
        # Specialized single-chunk path: no accumulator, no pl.when branches.
        out = pl.pallas_call(
            _mac_kernel_single,
            out_shape=jax.ShapeDtypeStruct((n_r * row_tile, 1), dtype),
            grid_spec=pltpu.PrefetchScalarGridSpec(
                num_scalar_prefetch=0,
                grid=(n_r,),
                in_specs=[pl.BlockSpec((row_tile, s_chunk), lambda i: (i, 0))],
                out_specs=pl.BlockSpec((row_tile, 1), lambda i: (i, 0)),
            ),
            compiler_params=pltpu.CompilerParams(
                dimension_semantics=("parallel",),
                vmem_limit_bytes=vmem_limit,
            ),
            cost_estimate=cost,
        )(xf)
    else:
        if jnp.issubdtype(dtype, jnp.floating):
            fill = float("-inf")
        elif dtype == jnp.bool_:
            fill = False
        else:
            fill = int(jnp.iinfo(dtype).min)

        kernel = functools.partial(
            _mac_kernel_chunked, n_k=n_k, s_chunk=s_chunk,
            tail_len=tail_len, fill=fill)

        out = pl.pallas_call(
            kernel,
            out_shape=jax.ShapeDtypeStruct((n_r * row_tile, 1), dtype),
            grid_spec=pltpu.PrefetchScalarGridSpec(
                num_scalar_prefetch=0,
                grid=(n_r, n_k),
                in_specs=[pl.BlockSpec((row_tile, s_chunk),
                                       lambda i, k: (i, k))],
                out_specs=pl.BlockSpec((row_tile, 1), lambda i, k: (i, 0)),
                scratch_shapes=[pltpu.VMEM((row_tile, _LANE), dtype)],
            ),
            compiler_params=pltpu.CompilerParams(
                dimension_semantics=("parallel", "arbitrary"),
                vmem_limit_bytes=vmem_limit,
            ),
            cost_estimate=cost,
        )(xf)

    # Rows >= r (ragged last row tile) hold unspecified values; slice them off.
    return out.reshape(-1)[:r].reshape(n, c, 1, 1)


def mac_pallas(x):
    """Global spatial max pooling (MAC). x: (N, C, H, W) -> (N, C, 1, 1)."""
    working, limit = _vmem_budget()
    return _mac_impl(x, working, limit)


def mac_ref(x):
    # Pure-JAX reference of torch.nn.functional.max_pool2d(x, (H, W)).
    return jnp.max(x, axis=(2, 3), keepdims=True)


class MAC:
    """Pallas/JAX counterpart of the PyTorch MAC module."""

    def __call__(self, x):
        return mac_pallas(x)

    def __repr__(self):
        return self.__class__.__name__ + "()"


if __name__ == "__main__":
    key = jax.random.PRNGKey(0)
    x = jax.random.normal(key, (2, 4, 16, 16), dtype=jnp.float32)

    y = MAC()(x)
    jax.block_until_ready(y)
    y_ref = mac_ref(x)
    assert y.shape == (2, 4, 1, 1), y.shape
    assert jnp.allclose(y, y_ref), "mismatch vs reference"

    # Default-budget extras:
    #   (3,5,7,9)  -> non-8/128 row & lane extents, single block
    #   (8,80,8,8) -> r=640: megacore row split into two 384-row tiles (ragged)
    for i, shape in enumerate(((3, 5, 7, 9), (8, 80, 8, 8))):
        xe = jax.random.normal(jax.random.PRNGKey(i + 1), shape,
                               dtype=jnp.float32)
        ye = mac_pallas(xe)
        jax.block_until_ready(ye)
        assert ye.shape == (shape[0], shape[1], 1, 1), ye.shape
        assert jnp.allclose(ye, mac_ref(xe)), f"mismatch vs reference at {shape}"

    # Exercise the remaining code paths deterministically with a small forced
    # working-set override (keeps the test arrays small on every chip):
    #   (1,8,160,160)  @1MiB   -> chunked S, evenly divisible (no masked tail)
    #   (1,8,160,150)  @1MiB   -> chunked S with masked ragged tail
    #   (2,150,16,160) @1MiB   -> r=300 chunked: 128-row tiles + ragged row tile
    #   (5,60,4,4)     @512KiB -> full-S path with row chunking (ragged rows)
    forced = (
        ((1, 8, 160, 160), 1 << 20, 4 << 20),
        ((1, 8, 160, 150), 1 << 20, 4 << 20),
        ((2, 150, 16, 160), 1 << 20, 4 << 20),
        ((5, 60, 4, 4), 512 << 10, 4 << 20),
    )
    for i, (shape, ws, lim) in enumerate(forced):
        xe = jax.random.normal(jax.random.PRNGKey(i + 10), shape,
                               dtype=jnp.float32)
        ye = _mac_impl(xe, ws, lim)
        jax.block_until_ready(ye)
        assert ye.shape == (shape[0], shape[1], 1, 1), ye.shape
        assert jnp.allclose(ye, mac_ref(xe)), f"mismatch vs reference at {shape}"

    print("KERNEL_OK")
</pallas_src>

<mosaic_0001>
module attributes {stable_mosaic.version = 11 : i64} {
  func.func @_mac_kernel_single(%arg0: i32, %arg1: memref<8x256xf32, #tpu.memory_space<vmem>>, %arg2: memref<8x1xf32, #tpu.memory_space<vmem>>) attributes {dimension_semantics = [#tpu.dimension_semantics<parallel>], iteration_bounds = array<i64: 1>, scalar_prefetch = 0 : i64, scratch_operands = 0 : i64, tpu.core_type = #tpu.core_type<tc>, window_params = [{transform_indices = @transform_0, window_bounds = array<i64: 8, 256>}, {transform_indices = @transform_1, window_bounds = array<i64: 8, 1>}]} {
    %c0 = arith.constant 0 : index
    %c0_0 = arith.constant 0 : index
    %0 = vector.load %arg1[%c0, %c0_0] : memref<8x256xf32, #tpu.memory_space<vmem>>, vector<8x256xf32>
    %cst = arith.constant dense<0xFF800000> : vector<8xf32>
    %1 = vector.multi_reduction <maximumf>, %0, %cst [1] : vector<8x256xf32> to vector<8xf32>
    %2 = vector.shape_cast %1 : vector<8xf32> to vector<8x1xf32>
    %c0_1 = arith.constant 0 : index
    %c0_2 = arith.constant 0 : index
    %3 = vector.load %arg2[%c0_1, %c0_2] : memref<8x1xf32, #tpu.memory_space<vmem>>, vector<8x1xf32>
    tpu.vector_store %arg2[%c0_1, %c0_2], %2 {strides = array<i32>} : memref<8x1xf32, #tpu.memory_space<vmem>>, vector<8x1xf32>,
    return
  }
  func.func @transform_0(%arg0: i32) -> (i32, i32) {
    %c0_i32 = arith.constant 0 : i32
    %c0_i32_0 = arith.constant 0 : i32
    return %arg0, %c0_i32 : i32, i32
  }
  func.func @transform_1(%arg0: i32) -> (i32, i32) {
    %c0_i32 = arith.constant 0 : i32
    %c0_i32_0 = arith.constant 0 : i32
    return %arg0, %c0_i32 : i32, i32
  }
}

</mosaic_0001>

<llo_original>
// kernel: _mac_impl.1
$region0: #{_mac_impl.1}
  #allocation0 [shape = 'u32[]', space=smem, size = 0x4, offset = 0x4, fixed_abs, tag = 'smem constant byte address 0x4 - core index']
  #allocation1 [shape = 'u32[144,128]{1,0:T(1,128)}', space=vmem, size = 0x12000, scoped, tag = 'internal scratch']
  %s0 = inlined_call_operand.vmem [shape: f32[8,256], index: 0, kind: input, shape index: {}]
  %s1 = inlined_call_operand.vmem [shape: f32[8,1], index: 1, kind: output, shape index: {}]
  %s2 = sld [smem:[#allocation0]]
  $region14: #{_mac_impl.1} parent=0
    _
  %s4 = ssub.s32 1, %s2
  %s5 = scalar_select 0, %s4, %s2
  // Predicated region
  $region2: #{_mac_impl.1} parent=0 // pred_check
    _
  $region3: #{_mac_impl.1} parent=0 // pred_check_branch
    %7 = sbr.rel (0) target = $region5
  $region4: #{_mac_impl.1} parent=0 // pred_region
    _
  $region5: #{_mac_impl.1} parent=0 // pred_fallthru
    _
  %v8 = vld [vmem:[%s0] sm:$0xff]
  %v9 = vld [vmem:[%s0 + $0x8] sm:$0xff]
  %v10 = vmax.f32 %v8, %v9
  %11 = vmax.xlane.f32.xlu0 %v10
  %v12 = vpop.xlane.xlu0 %11
  %vm13 = vcmask 7168
  %14 = vst.msk [vmem:[%s1] sm:$0xff] %vm13, %v12
  // Predicated region
  $region6: #{_mac_impl.1} parent=0 // pred_check
    _
  $region7: #{_mac_impl.1} parent=0 // pred_check_branch
    %16 = sbr.rel (0) target = $region9
  $region8: #{_mac_impl.1} parent=0 // pred_region
    _
  $region9: #{_mac_impl.1} parent=0 // pred_fallthru
    _
  // Predicated region
  $region10: #{_mac_impl.1} parent=0 // pred_check
    _
  $region11: #{_mac_impl.1} parent=0 // pred_check_branch
    %18 = sbr.rel (0) target = $region13
  $region12: #{_mac_impl.1} parent=0 // pred_region
    _
  $region13: #{_mac_impl.1} parent=0 // pred_fallthru
    _

</llo_original>
